<compile_context>
chip_gen: v5e
topology: v5e:2x2
jax: 0.10.0
libtpu: 0.0.40
codegen_flags: <defaults>
</compile_context>

<pallas_src>
import math

import jax
import jax.numpy as jnp
from jax.experimental import pallas as pl
from jax.experimental.pallas import tpu as pltpu


def dqn_kernel(x_ref, w1_ref, b1_ref, w2_ref, b2_ref, w3_ref, b3_ref, o_ref):
    # fc1 + relu  (bf16 inputs, f32 accumulation)
    h1 = jnp.dot(x_ref[...], w1_ref[...], preferred_element_type=jnp.float32)
    h1 = jnp.maximum(h1 + b1_ref[...], 0.0)
    # fc2 + relu
    h2 = jnp.dot(h1.astype(w2_ref.dtype), w2_ref[...],
                 preferred_element_type=jnp.float32)
    h2 = jnp.maximum(h2 + b2_ref[...], 0.0)
    # out (no activation); padded action lanes carry zeros from padded w3/b3.
    o = jnp.dot(h2.astype(w3_ref.dtype), w3_ref[...],
                preferred_element_type=jnp.float32)
    o_ref[...] = (o + b3_ref[...]).astype(o_ref.dtype)


def dq_network_forward(x, params, *, block_b=512, compute_dtype=jnp.bfloat16):
    """x: [B, state_dim] float32. params: dict of (w1,b1,w2,b2,w3,b3) with
    weights stored as [in_features, out_features] and biases as [1, out]."""
    w1, b1, w2, b2, w3, b3 = (
        params["w1"], params["b1"], params["w2"],
        params["b2"], params["w3"], params["b3"],
    )
    B, state_dim = x.shape
    hidden = w1.shape[1]
    action_dim = w3.shape[1]

    # --- lane-dense output: pad action_dim up to a multiple of 128 ---
    padded_act = max(128, pl.cdiv(action_dim, 128) * 128)
    if padded_act != action_dim:
        w3 = jnp.pad(w3, ((0, 0), (0, padded_act - action_dim)))
        b3 = jnp.pad(b3, ((0, 0), (0, padded_act - action_dim)))

    # --- compute dtype: bf16 for the batch-scaled input and all weights ---
    xc = x.astype(compute_dtype)
    w1c = w1.astype(compute_dtype)
    w2c = w2.astype(compute_dtype)
    w3c = w3.astype(compute_dtype)
    b1f = b1.astype(jnp.float32)
    b2f = b2.astype(jnp.float32)
    b3f = b3.astype(jnp.float32)

    # --- batch tiling: sublane-aligned tile, pad B up to a multiple of it ---
    tb = min(block_b, max(8, pl.cdiv(B, 8) * 8))  # multiple of 8
    b_pad = pl.cdiv(B, tb) * tb
    if b_pad != B:
        xc = jnp.pad(xc, ((0, b_pad - B), (0, 0)))

    grid = (b_pad // tb,)
    resident = lambda i: (0, 0)  # weights/biases: same block every grid step

    out = pl.pallas_call(
        dqn_kernel,
        out_shape=jax.ShapeDtypeStruct((b_pad, padded_act), jnp.float32),
        grid=grid,
        in_specs=[
            pl.BlockSpec((tb, state_dim), lambda i: (i, 0)),       # x (pipelined)
            pl.BlockSpec((state_dim, hidden), resident),           # w1
            pl.BlockSpec((1, hidden), resident),                   # b1
            pl.BlockSpec((hidden, hidden), resident),              # w2
            pl.BlockSpec((1, hidden), resident),                   # b2
            pl.BlockSpec((hidden, padded_act), resident),          # w3 (padded)
            pl.BlockSpec((1, padded_act), resident),               # b3 (padded)
        ],
        out_specs=pl.BlockSpec((tb, padded_act), lambda i: (i, 0)),
        compiler_params=pltpu.CompilerParams(
            dimension_semantics=("parallel",),   # shard batch tiles across TCs (v7x)
        ),
    )(xc, w1c, b1f, w2c, b2f, w3c, b3f)

    # Drop batch padding and the padded action lanes.
    return out[:B, :action_dim]


def init_params(key, state_dim, action_dim, hidden=64):
    """PyTorch nn.Linear default init: U(-1/sqrt(fan_in), 1/sqrt(fan_in))."""
    keys = jax.random.split(key, 6)

    def linear(kw, kb, fan_in, fan_out):
        bound = 1.0 / math.sqrt(fan_in)
        w = jax.random.uniform(kw, (fan_in, fan_out), jnp.float32, -bound, bound)
        b = jax.random.uniform(kb, (1, fan_out), jnp.float32, -bound, bound)
        return w, b

    w1, b1 = linear(keys[0], keys[1], state_dim, hidden)
    w2, b2 = linear(keys[2], keys[3], hidden, hidden)
    w3, b3 = linear(keys[4], keys[5], hidden, action_dim)
    return {"w1": w1, "b1": b1, "w2": w2, "b2": b2, "w3": w3, "b3": b3}


def reference_forward(x, params):
    h1 = jnp.maximum(x @ params["w1"] + params["b1"], 0.0)
    h2 = jnp.maximum(h1 @ params["w2"] + params["b2"], 0.0)
    return h2 @ params["w3"] + params["b3"]


if __name__ == "__main__":
    key = jax.random.PRNGKey(0)
    k_params, k_x = jax.random.split(key)

    batch = 2
    state_dim = 8
    action_dim = 4

    params = init_params(k_params, state_dim, action_dim, hidden=64)
    x = jax.random.normal(k_x, (batch, state_dim), jnp.float32)
    ref = reference_forward(x, params)

    # 1) f32 compute path: exact check vs reference.
    out_f32 = dq_network_forward(x, params, compute_dtype=jnp.float32)
    out_f32 = jax.block_until_ready(out_f32)
    assert out_f32.shape == (batch, action_dim)
    assert jnp.allclose(out_f32, ref, atol=1e-5, rtol=1e-5), "f32 mismatch vs reference"

    # 2) default bf16 compute path (HBM/MXU-optimized): loose check vs f32 reference.
    out_bf16 = dq_network_forward(x, params)  # compute_dtype=bfloat16
    out_bf16 = jax.block_until_ready(out_bf16)
    assert out_bf16.shape == (batch, action_dim)
    assert jnp.allclose(out_bf16, ref, atol=5e-2, rtol=5e-2), "bf16 mismatch vs reference"

    print("KERNEL_OK")
</pallas_src>

<mosaic_0001>
module attributes {stable_mosaic.version = 11 : i64} {
  func.func @dqn_kernel(%arg0: i32, %arg1: memref<8x8xf32, #tpu.memory_space<vmem>>, %arg2: memref<8x64xf32, #tpu.memory_space<vmem>>, %arg3: memref<1x64xf32, #tpu.memory_space<vmem>>, %arg4: memref<64x64xf32, #tpu.memory_space<vmem>>, %arg5: memref<1x64xf32, #tpu.memory_space<vmem>>, %arg6: memref<64x128xf32, #tpu.memory_space<vmem>>, %arg7: memref<1x128xf32, #tpu.memory_space<vmem>>, %arg8: memref<8x128xf32, #tpu.memory_space<vmem>>) attributes {dimension_semantics = [#tpu.dimension_semantics<parallel>], iteration_bounds = array<i64: 1>, scalar_prefetch = 0 : i64, scratch_operands = 0 : i64, tpu.core_type = #tpu.core_type<tc>, window_params = [{transform_indices = @transform_0, window_bounds = array<i64: 8, 8>}, {pipeline_mode = #tpu.pipeline_mode<synchronous>, transform_indices = @transform_1, window_bounds = array<i64: 8, 64>}, {pipeline_mode = #tpu.pipeline_mode<synchronous>, transform_indices = @transform_2, window_bounds = array<i64: 1, 64>}, {pipeline_mode = #tpu.pipeline_mode<synchronous>, transform_indices = @transform_3, window_bounds = array<i64: 64, 64>}, {pipeline_mode = #tpu.pipeline_mode<synchronous>, transform_indices = @transform_4, window_bounds = array<i64: 1, 64>}, {pipeline_mode = #tpu.pipeline_mode<synchronous>, transform_indices = @transform_5, window_bounds = array<i64: 64, 128>}, {pipeline_mode = #tpu.pipeline_mode<synchronous>, transform_indices = @transform_6, window_bounds = array<i64: 1, 128>}, {transform_indices = @transform_7, window_bounds = array<i64: 8, 128>}]} {
    %c0 = arith.constant 0 : index
    %c0_0 = arith.constant 0 : index
    %0 = vector.load %arg1[%c0, %c0_0] : memref<8x8xf32, #tpu.memory_space<vmem>>, vector<8x8xf32>
    %c0_1 = arith.constant 0 : index
    %c0_2 = arith.constant 0 : index
    %1 = vector.load %arg2[%c0_1, %c0_2] : memref<8x64xf32, #tpu.memory_space<vmem>>, vector<8x64xf32>
    %cst = arith.constant dense<0.000000e+00> : vector<8x64xf32>
    %2 = tpu.matmul %0, %1, %cst {dimension_numbers = #tpu.dot_dimension_numbers<[1], [0], [0], [1], [0, 0, 1, 1], [], []>} : vector<8x8xf32>, vector<8x64xf32>, vector<8x64xf32> -> vector<8x64xf32>
    %c0_3 = arith.constant 0 : index
    %c0_4 = arith.constant 0 : index
    %3 = vector.load %arg3[%c0_3, %c0_4] : memref<1x64xf32, #tpu.memory_space<vmem>>, vector<1x64xf32>
    %4 = vector.broadcast %3 : vector<1x64xf32> to vector<8x64xf32>
    %5 = arith.addf %2, %4 : vector<8x64xf32>
    %cst_5 = arith.constant 0.000000e+00 : f32
    %6 = vector.broadcast %cst_5 : f32 to vector<8x64xf32>
    %7 = arith.maximumf %5, %6 : vector<8x64xf32>
    %c0_6 = arith.constant 0 : index
    %c0_7 = arith.constant 0 : index
    %8 = vector.load %arg4[%c0_6, %c0_7] : memref<64x64xf32, #tpu.memory_space<vmem>>, vector<64x64xf32>
    %cst_8 = arith.constant dense<0.000000e+00> : vector<8x64xf32>
    %9 = tpu.matmul %7, %8, %cst_8 {dimension_numbers = #tpu.dot_dimension_numbers<[1], [0], [0], [1], [0, 0, 1, 1], [], []>} : vector<8x64xf32>, vector<64x64xf32>, vector<8x64xf32> -> vector<8x64xf32>
    %c0_9 = arith.constant 0 : index
    %c0_10 = arith.constant 0 : index
    %10 = vector.load %arg5[%c0_9, %c0_10] : memref<1x64xf32, #tpu.memory_space<vmem>>, vector<1x64xf32>
    %11 = vector.broadcast %10 : vector<1x64xf32> to vector<8x64xf32>
    %12 = arith.addf %9, %11 : vector<8x64xf32>
    %cst_11 = arith.constant 0.000000e+00 : f32
    %13 = vector.broadcast %cst_11 : f32 to vector<8x64xf32>
    %14 = arith.maximumf %12, %13 : vector<8x64xf32>
    %c0_12 = arith.constant 0 : index
    %c0_13 = arith.constant 0 : index
    %15 = vector.load %arg6[%c0_12, %c0_13] : memref<64x128xf32, #tpu.memory_space<vmem>>, vector<64x128xf32>
    %cst_14 = arith.constant dense<0.000000e+00> : vector<8x128xf32>
    %16 = tpu.matmul %14, %15, %cst_14 {dimension_numbers = #tpu.dot_dimension_numbers<[1], [0], [0], [1], [0, 0, 1, 1], [], []>} : vector<8x64xf32>, vector<64x128xf32>, vector<8x128xf32> -> vector<8x128xf32>
    %c0_15 = arith.constant 0 : index
    %c0_16 = arith.constant 0 : index
    %17 = vector.load %arg7[%c0_15, %c0_16] : memref<1x128xf32, #tpu.memory_space<vmem>>, vector<1x128xf32>
    %18 = vector.broadcast %17 : vector<1x128xf32> to vector<8x128xf32>
    %19 = arith.addf %16, %18 : vector<8x128xf32>
    %c0_17 = arith.constant 0 : index
    %c0_18 = arith.constant 0 : index
    %20 = vector.load %arg8[%c0_17, %c0_18] : memref<8x128xf32, #tpu.memory_space<vmem>>, vector<8x128xf32>
    tpu.vector_store %arg8[%c0_17, %c0_18], %19 {strides = array<i32>} : memref<8x128xf32, #tpu.memory_space<vmem>>, vector<8x128xf32>,
    return
  }
  func.func @transform_0(%arg0: i32) -> (i32, i32) {
    %c0_i32 = arith.constant 0 : i32
    %c0_i32_0 = arith.constant 0 : i32
    return %arg0, %c0_i32 : i32, i32
  }
  func.func @transform_1(%arg0: i32) -> (i32, i32) {
    %c0_i32 = arith.constant 0 : i32
    %c0_i32_0 = arith.constant 0 : i32
    %c0_i32_1 = arith.constant 0 : i32
    return %c0_i32, %c0_i32_0 : i32, i32
  }
  func.func @transform_2(%arg0: i32) -> (i32, i32) {
    %c0_i32 = arith.constant 0 : i32
    %c0_i32_0 = arith.constant 0 : i32
    %c0_i32_1 = arith.constant 0 : i32
    return %c0_i32, %c0_i32_0 : i32, i32
  }
  func.func @transform_3(%arg0: i32) -> (i32, i32) {
    %c0_i32 = arith.constant 0 : i32
    %c0_i32_0 = arith.constant 0 : i32
    %c0_i32_1 = arith.constant 0 : i32
    return %c0_i32, %c0_i32_0 : i32, i32
  }
  func.func @transform_4(%arg0: i32) -> (i32, i32) {
    %c0_i32 = arith.constant 0 : i32
    %c0_i32_0 = arith.constant 0 : i32
    %c0_i32_1 = arith.constant 0 : i32
    return %c0_i32, %c0_i32_0 : i32, i32
  }
  func.func @transform_5(%arg0: i32) -> (i32, i32) {
    %c0_i32 = arith.constant 0 : i32
    %c0_i32_0 = arith.constant 0 : i32
    %c0_i32_1 = arith.constant 0 : i32
    return %c0_i32, %c0_i32_0 : i32, i32
  }
  func.func @transform_6(%arg0: i32) -> (i32, i32) {
    %c0_i32 = arith.constant 0 : i32
    %c0_i32_0 = arith.constant 0 : i32
    %c0_i32_1 = arith.constant 0 : i32
    return %c0_i32, %c0_i32_0 : i32, i32
  }
  func.func @transform_7(%arg0: i32) -> (i32, i32) {
    %c0_i32 = arith.constant 0 : i32
    %c0_i32_0 = arith.constant 0 : i32
    return %arg0, %c0_i32 : i32, i32
  }
}

</mosaic_0001>

<llo_original>
// kernel: tpu_custom_call.1
$region0: #{tpu_custom_call.1}
  #allocation0 [shape = 'u32[]', space=smem, size = 0x4, offset = 0x4, fixed_abs, tag = 'smem constant byte address 0x4 - core index']
  #allocation1 [shape = 'u32[72,128]{1,0:T(1,128)}', space=vmem, size = 0x9000, scoped, tag = 'internal scratch']
  %s0 = inlined_call_operand.hbm [shape: f32[8,8], index: 0, kind: input, shape index: {}]
  %s1 = inlined_call_operand.hbm [shape: f32[8,64], index: 1, kind: input, shape index: {}]
  %s2 = inlined_call_operand.vmem [shape: f32[1,64], index: 2, kind: input, shape index: {}]
  %s3 = inlined_call_operand.hbm [shape: f32[64,64], index: 3, kind: input, shape index: {}]
  %s4 = inlined_call_operand.vmem [shape: f32[1,64], index: 4, kind: input, shape index: {}]
  %s5 = inlined_call_operand.hbm [shape: f32[64,128], index: 5, kind: input, shape index: {}]
  %s6 = inlined_call_operand.vmem [shape: f32[1,128], index: 6, kind: input, shape index: {}]
  %s7 = inlined_call_operand.hbm [shape: f32[8,128], index: 7, kind: output, shape index: {}]
  %s8 = sld [smem:[#allocation0]]
  $region54: #{tpu_custom_call.1} parent=0
    _
  %s10 = ssub.s32 1, %s8
  %s11 = scalar_select 0, %s10, %s8
  $region1: #{tpu_custom_call.1} parent=0
    #allocation2 [shape = 'u8[4096]{0}', space=vmem, size = 0x1000, scoped, tag = 'input window, operand 0, single buffered']
    #allocation3 [shape = 's32[1]{0}', space=sflag, size = 0x4, scoped, tag = 'scoped memory for tpu_custom_call.1']
    #allocation4 [shape = 's32[1]{0}', space=sflag, size = 0x4, scoped, tag = 'scoped memory for tpu_custom_call.1']
    #allocation5 [shape = 'u8[4096]{0}', space=vmem, size = 0x1000, scoped, tag = 'input window, operand 1, single buffered']
    #allocation6 [shape = 's32[1]{0}', space=sflag, size = 0x4, scoped, tag = 'scoped memory for tpu_custom_call.1']
    #allocation7 [shape = 'u8[32768]{0}', space=vmem, size = 0x8000, scoped, tag = 'input window, operand 3, single buffered']
    #allocation8 [shape = 'u8[32768]{0}', space=vmem, size = 0x8000, scoped, tag = 'input window, operand 5, single buffered']
    #allocation9 [shape = 's32[1]{0}', space=sflag, size = 0x4, scoped, tag = 'scoped memory for tpu_custom_call.1']
    #allocation10 [shape = 'u8[4096]{0}', space=vmem, size = 0x1000, scoped, tag = 'output window, operand 0, single buffered']
    %12 = vsyncpa [#allocation3], 0
    %13 = vsyncpa [#allocation6], 0
    %14 = vsyncpa [#allocation9], 0
    %15 = vsyncpa [#allocation4], 0
    // Predicated region
    $region2: #{tpu_custom_call.1} parent=1 // pred_check
      _
    $region3: #{tpu_custom_call.1} parent=1 // pred_check_branch
      %17 = sbr.rel (0) target = $region5
    $region4: #{tpu_custom_call.1} parent=1 // pred_region
      %19 = vsyncadd [#allocation3], 0
      %s21 = sshll.u32 %s0, 4
      %s22 = int_to_ptr.hbm [resolvable:$true] %s21
      %s23 = sshll.u32 [#allocation2], 4
      %s24 = int_to_ptr.vmem [resolvable:$true] %s23
      %26 = dma.hbm_to_vmem [thread:$0]  %s22, 128, %s24, [#allocation3]
    $region5: #{tpu_custom_call.1} parent=1 // pred_fallthru
      _
    // Predicated region
    $region6: #{tpu_custom_call.1} parent=1 // pred_check
      _
    $region7: #{tpu_custom_call.1} parent=1 // pred_check_branch
      %28 = sbr.rel (0) target = $region9
    $region8: #{tpu_custom_call.1} parent=1 // pred_region
      %30 = vsyncadd [#allocation6], 0
      %s32 = sshll.u32 %s1, 4
      %s33 = int_to_ptr.hbm [resolvable:$true] %s32
      %s34 = sshll.u32 [#allocation5], 4
      %s35 = int_to_ptr.vmem [resolvable:$true] %s34
      %37 = dma.hbm_to_vmem [thread:$0]  %s33, 128, %s35, [#allocation6]
    $region9: #{tpu_custom_call.1} parent=1 // pred_fallthru
      _
    // Predicated region
    $region10: #{tpu_custom_call.1} parent=1 // pred_check
      _
    $region11: #{tpu_custom_call.1} parent=1 // pred_check_branch
      %39 = sbr.rel (0) target = $region13
    $region12: #{tpu_custom_call.1} parent=1 // pred_region
      _
    $region13: #{tpu_custom_call.1} parent=1 // pred_fallthru
      _
    // Predicated region
    $region14: #{tpu_custom_call.1} parent=1 // pred_check
      _
    $region15: #{tpu_custom_call.1} parent=1 // pred_check_branch
      %41 = sbr.rel (0) target = $region17
    $region16: #{tpu_custom_call.1} parent=1 // pred_region
      %43 = vsyncadd [#allocation6], 0
      %s44 = sshll.u32 %s3, 4
      %s45 = int_to_ptr.hbm [resolvable:$true] %s44
      %s46 = sshll.u32 [#allocation7], 4
      %s47 = int_to_ptr.vmem [resolvable:$true] %s46
      %52 = dma.hbm_to_vmem [thread:$0]  %s45, 1024, %s47, [#allocation6], 128, 128, 8
    $region17: #{tpu_custom_call.1} parent=1 // pred_fallthru
      _
    // Predicated region
    $region18: #{tpu_custom_call.1} parent=1 // pred_check
      _
    $region19: #{tpu_custom_call.1} parent=1 // pred_check_branch
      %54 = sbr.rel (0) target = $region21
    $region20: #{tpu_custom_call.1} parent=1 // pred_region
      _
    $region21: #{tpu_custom_call.1} parent=1 // pred_fallthru
      _
    // Predicated region
    $region22: #{tpu_custom_call.1} parent=1 // pred_check
      _
    $region23: #{tpu_custom_call.1} parent=1 // pred_check_branch
      %56 = sbr.rel (0) target = $region25
    $region24: #{tpu_custom_call.1} parent=1 // pred_region
      %58 = vsyncadd [#allocation9], 0
      %s59 = sshll.u32 %s5, 4
      %s60 = int_to_ptr.hbm [resolvable:$true] %s59
      %s61 = sshll.u32 [#allocation8], 4
      %s62 = int_to_ptr.vmem [resolvable:$true] %s61
      %67 = dma.hbm_to_vmem [thread:$0]  %s60, 1024, %s62, [#allocation9], 128, 128, 8
    $region25: #{tpu_custom_call.1} parent=1 // pred_fallthru
      _
    // Predicated region
    $region26: #{tpu_custom_call.1} parent=1 // pred_check
      _
    $region27: #{tpu_custom_call.1} parent=1 // pred_check_branch
      %69 = sbr.rel (0) target = $region29
    $region28: #{tpu_custom_call.1} parent=1 // pred_region
      _
    $region29: #{tpu_custom_call.1} parent=1 // pred_fallthru
      _
    // Predicated region
    $region30: #{tpu_custom_call.1} parent=1 // pred_check
      _
    $region31: #{tpu_custom_call.1} parent=1 // pred_check_branch
      %71 = sbr.rel (0) target = $region33
    $region32: #{tpu_custom_call.1} parent=1 // pred_region
      %73 = dma.done [#allocation3], 128
    $region33: #{tpu_custom_call.1} parent=1 // pred_fallthru
      _
    // Predicated region
    $region34: #{tpu_custom_call.1} parent=1 // pred_check
      _
    $region35: #{tpu_custom_call.1} parent=1 // pred_check_branch
      %75 = sbr.rel (0) target = $region37
    $region36: #{tpu_custom_call.1} parent=1 // pred_region
      %77 = dma.done [#allocation6], 128
    $region37: #{tpu_custom_call.1} parent=1 // pred_fallthru
      _
    // Predicated region
    $region38: #{tpu_custom_call.1} parent=1 // pred_check
      _
    $region39: #{tpu_custom_call.1} parent=1 // pred_check_branch
      %79 = sbr.rel (0) target = $region41
    $region40: #{tpu_custom_call.1} parent=1 // pred_region
      %81 = dma.done [#allocation6], 1024
    $region41: #{tpu_custom_call.1} parent=1 // pred_fallthru
      _
    // Predicated region
    $region42: #{tpu_custom_call.1} parent=1 // pred_check
      _
    $region43: #{tpu_custom_call.1} parent=1 // pred_check_branch
      %83 = sbr.rel (0) target = $region45
    $region44: #{tpu_custom_call.1} parent=1 // pred_region
      %85 = dma.done [#allocation9], 1024
    $region45: #{tpu_custom_call.1} parent=1 // pred_fallthru
      _
    %v86 = vld [vmem:[#allocation2] sm:$0xff]
    %v87 = vld [vmem:[#allocation5] sm:$0xff]
    %v88 = vld [vmem:[%s2] sm:$0x1]
    %v90 = vperm.slane %v88, 0
    %vm92 = vcmask 64512
    %v94 = vsel %vm92, %v86, 0
    %96 = vmatpush.msra.mxu0 0.0
    %97 = vmatpush.msra.mxu0 0.0
    %98 = vmatpush.msra.mxu0 0.0
    %99 = vmatpush.msra.mxu0 0.0
    %100 = vmatpush.msra.mxu0 0.0
    %101 = vmatpush.msra.mxu0 0.0
    %102 = vmatpush.msra.mxu0 0.0
    %103 = vmatpush.msra.mxu0 0.0
    %104 = vmatpush.msra.mxu0 0.0
    %105 = vmatpush.msra.mxu0 0.0
    %106 = vmatpush.msra.mxu0 0.0
    %107 = vmatpush.msra.mxu0 0.0
    %108 = vmatpush.msra.mxu0 0.0
    %109 = vmatpush.msra.mxu0 0.0
    %110 = vmatpush.msra.mxu0 0.0
    %111 = vmatpush.msra.mxu0 %v87
    %112 = vmatmul.f32.gmra.mxu0 %v94
    %v113 = vpop.f32.mrf.mxu0
    %v114 = vadd.f32 %v90, %v113
    %115 = vdwg.mxu0
    %v116 = vmax.f32 %v114, 0.0
    %v117 = vld [vmem:[#allocation7] sm:$0xff]
    %v118 = vld [vmem:[#allocation7 + $0x8] sm:$0xff]
    %v119 = vld [vmem:[#allocation7 + $0x10] sm:$0xff]
    %v120 = vld [vmem:[#allocation7 + $0x18] sm:$0xff]
    %v121 = vld [vmem:[#allocation7 + $0x20] sm:$0xff]
    %v122 = vld [vmem:[#allocation7 + $0x28] sm:$0xff]
    %v123 = vld [vmem:[#allocation7 + $0x30] sm:$0xff]
    %v124 = vld [vmem:[#allocation7 + $0x38] sm:$0xff]
    %v125 = vld [vmem:[%s4] sm:$0x1]
    %v127 = vperm.slane %v125, 0
    %vm129 = vcmask 523264
    %v131 = vsel %vm129, %v116, 0
    %133 = vmatpush.msra.mxu0 0.0
    %134 = vmatpush.msra.mxu0 0.0
    %135 = vmatpush.msra.mxu0 0.0
    %136 = vmatpush.msra.mxu0 0.0
    %137 = vmatpush.msra.mxu0 0.0
    %138 = vmatpush.msra.mxu0 0.0
    %139 = vmatpush.msra.mxu0 0.0
    %140 = vmatpush.msra.mxu0 0.0
    %141 = vmatpush.msra.mxu0 %v124
    %142 = vmatpush.msra.mxu0 %v123
    %143 = vmatpush.msra.mxu0 %v122
    %144 = vmatpush.msra.mxu0 %v121
    %145 = vmatpush.msra.mxu0 %v120
    %146 = vmatpush.msra.mxu0 %v119
    %147 = vmatpush.msra.mxu0 %v118
    %148 = vmatpush.msra.mxu0 %v117
    %149 = vmatmul.f32.gmra.mxu0 %v131
    %v150 = vpop.f32.mrf.mxu0
    %v151 = vadd.f32 %v127, %v150
    %152 = vdwg.mxu0
    %v153 = vmax.f32 %v151, 0.0
    %v154 = vld [vmem:[#allocation8] sm:$0xff]
    %v155 = vld [vmem:[#allocation8 + $0x8] sm:$0xff]
    %v156 = vld [vmem:[#allocation8 + $0x10] sm:$0xff]
    %v157 = vld [vmem:[#allocation8 + $0x18] sm:$0xff]
    %v158 = vld [vmem:[#allocation8 + $0x20] sm:$0xff]
    %v159 = vld [vmem:[#allocation8 + $0x28] sm:$0xff]
    %v160 = vld [vmem:[#allocation8 + $0x30] sm:$0xff]
    %v161 = vld [vmem:[#allocation8 + $0x38] sm:$0xff]
    %v162 = vld [vmem:[%s6] sm:$0x1]
    %v164 = vperm.slane %v162, 0
    %v167 = vsel %vm129, %v153, 0
    %169 = vmatpush.msra.mxu0 0.0
    %170 = vmatpush.msra.mxu0 0.0
    %171 = vmatpush.msra.mxu0 0.0
    %172 = vmatpush.msra.mxu0 0.0
    %173 = vmatpush.msra.mxu0 0.0
    %174 = vmatpush.msra.mxu0 0.0
    %175 = vmatpush.msra.mxu0 0.0
    %176 = vmatpush.msra.mxu0 0.0
    %177 = vmatpush.msra.mxu0 %v161
    %178 = vmatpush.msra.mxu0 %v160
    %179 = vmatpush.msra.mxu0 %v159
    %180 = vmatpush.msra.mxu0 %v158
    %181 = vmatpush.msra.mxu0 %v157
    %182 = vmatpush.msra.mxu0 %v156
    %183 = vmatpush.msra.mxu0 %v155
    %184 = vmatpush.msra.mxu0 %v154
    %185 = vmatmul.f32.gmra.mxu0 %v167
    %v186 = vpop.f32.mrf.mxu0
    %v187 = vadd.f32 %v164, %v186
    %188 = vdwg.mxu0
    %189 = vst [vmem:[#allocation10] sm:$0xff] %v187
    // Predicated region
    $region46: #{tpu_custom_call.1} parent=1 // pred_check
      _
    $region47: #{tpu_custom_call.1} parent=1 // pred_check_branch
      %191 = sbr.rel (0) target = $region49
    $region48: #{tpu_custom_call.1} parent=1 // pred_region
      %193 = vsyncadd [#allocation4], 0
      %s195 = sshll.u32 [#allocation10], 4
      %s196 = int_to_ptr.vmem [resolvable:$true] %s195
      %s197 = sshll.u32 %s7, 4
      %s198 = int_to_ptr.hbm [resolvable:$true] %s197
      %200 = dma.vmem_to_hbm [thread:$0]  %s196, 128, %s198, [#allocation4]
    $region49: #{tpu_custom_call.1} parent=1 // pred_fallthru
      _
    // Predicated region
    $region50: #{tpu_custom_call.1} parent=1 // pred_check
      _
    $region51: #{tpu_custom_call.1} parent=1 // pred_check_branch
      %202 = sbr.rel (0) target = $region53
    $region52: #{tpu_custom_call.1} parent=1 // pred_region
      %204 = dma.done [#allocation4], 128
    $region53: #{tpu_custom_call.1} parent=1 // pred_fallthru
      _
    %205 = vsyncpa [#allocation3], 1
    %206 = vsyncpa [#allocation6], 1
    %207 = vsyncpa [#allocation9], 1
    %208 = vsyncpa [#allocation4], 1

</llo_original>
